<compile_context>
chip_gen: v5e
topology: v5e:2x2
jax: 0.10.0
libtpu: 0.0.40
codegen_flags: <defaults>
</compile_context>

<pallas_src>
from dataclasses import dataclass

import jax
import jax.numpy as jnp
from jax.experimental import pallas as pl
from jax.experimental.pallas import tpu as pltpu

LANE = 128


def _round_up(x, m):
    return ((x + m - 1) // m) * m


def _vmem_cap_bytes():
    # Physical per-TC VMEM: 128 MiB on v5e/v6e, 64 MiB on v7x. Query when possible,
    # conservative (v7x) fallback otherwise.
    try:
        return int(pltpu.get_tpu_info().vmem_capacity_bytes)
    except Exception:
        return 64 << 20


@dataclass(frozen=True)
class FFParams:
    w1: jax.Array      # [in_p, hid_p]  bf16 (transposed, zero-padded)
    scale: jax.Array   # [1, hid_p]     f32  BN scale (kept out of bf16 weights)
    b1: jax.Array      # [1, hid_p]     f32  folded bias: b1*scale + beta - rm*scale
    w2: jax.Array      # [hid_p, ncls_p] bf16
    b2: jax.Array      # [1, ncls_p]    f32
    in_dim: int
    n_classes: int
    in_p: int
    hid_p: int
    ncls_p: int
    th: int            # hidden chunk size (multiple of 128, divides hid_p)


def ff_classifier_kernel(x_ref, w1_ref, s_ref, b1_ref, w2_ref, b2_ref, o_ref):
    k = pl.program_id(1)

    @pl.when(k == 0)
    def _init():
        # Initialize the f32 logits block (resident across the hidden-chunk axis) with b2.
        o_ref[...] = jnp.broadcast_to(b2_ref[...], o_ref.shape)

    # Layer 1 (one hidden chunk): MXU matmul with bf16 operands, f32 accumulation,
    # then BatchNorm (f32 per-channel scale + folded bias) and ReLU on the VPU.
    h = jnp.dot(x_ref[...], w1_ref[...], preferred_element_type=jnp.float32)
    h = jnp.maximum(h * s_ref[...] + b1_ref[...], 0.0)
    # Dropout: identity in eval mode.
    # Layer 2 (partial): accumulate this chunk's contribution into the logits block.
    o_ref[...] += jnp.dot(h.astype(w2_ref.dtype), w2_ref[...],
                          preferred_element_type=jnp.float32)


def prepare_ff_params(w1, b1, w2, b2, gamma, beta, running_mean, running_var,
                      eps=1e-5, hidden_chunk=1024):
    """One-time, x-independent weight preparation (hoisted out of the per-call path).

    w1: [hidden, input_dim], b1: [hidden]           (PyTorch Linear layout)
    w2: [n_classes, hidden], b2: [n_classes]
    gamma/beta/running_mean/running_var: [hidden]   (BatchNorm1d eval stats)
    """
    hidden, in_dim = w1.shape
    n_classes = w2.shape[0]

    in_p = _round_up(in_dim, LANE)
    th = min(_round_up(hidden, LANE), _round_up(hidden_chunk, LANE))
    hid_p = _round_up(hidden, th)
    ncls_p = _round_up(n_classes, LANE)

    # BN (eval) fold: y = h*scale + (beta - rm*scale). Keep scale in f32 (applied in-kernel
    # after the matmul); fold b1 into the additive term only.
    scale = (gamma / jnp.sqrt(running_var + eps)).astype(jnp.float32)
    bias = (b1 * scale + beta - running_mean * scale).astype(jnp.float32)

    # Zero padding is numerically harmless: padded hidden columns get scale=bias=0 ->
    # relu(0)=0 and zero w2 rows; padded in_dim / class dims are zero / sliced off.
    w1_p = jnp.zeros((in_p, hid_p), jnp.bfloat16).at[:in_dim, :hidden].set(
        w1.T.astype(jnp.bfloat16))
    w2_p = jnp.zeros((hid_p, ncls_p), jnp.bfloat16).at[:hidden, :n_classes].set(
        w2.T.astype(jnp.bfloat16))
    s_p = jnp.zeros((1, hid_p), jnp.float32).at[0, :hidden].set(scale)
    b1_p = jnp.zeros((1, hid_p), jnp.float32).at[0, :hidden].set(bias)
    b2_p = jnp.zeros((1, ncls_p), jnp.float32).at[0, :n_classes].set(
        b2.astype(jnp.float32))

    return FFParams(w1=w1_p, scale=s_p, b1=b1_p, w2=w2_p, b2=b2_p,
                    in_dim=in_dim, n_classes=n_classes,
                    in_p=in_p, hid_p=hid_p, ncls_p=ncls_p, th=th)


def ff_classifier_forward(x, params: FFParams, block_b=512):
    """Eval-mode forward: relu(BN(x @ w1.T + b1)) @ w2.T + b2. Returns [B, n_classes] f32."""
    B, in_dim = x.shape
    assert in_dim == params.in_dim
    in_p, hid_p, ncls_p, th = params.in_p, params.hid_p, params.ncls_p, params.th

    # Batch tile: big (512, 256-aligned for v6e/v7x MXU) when B allows; round small B to 16
    # (bf16 sublane packing) instead of 8.
    tb = _round_up(min(block_b, _round_up(B, 16)), 16)
    b_p = _round_up(B, tb)

    # Single fused pad+cast of x; skipped when already aligned.
    if b_p == B and in_p == in_dim:
        x_bf = x.astype(jnp.bfloat16)
    else:
        x_bf = jnp.zeros((b_p, in_p), jnp.bfloat16).at[:B, :in_dim].set(
            x.astype(jnp.bfloat16))

    nb, nk = b_p // tb, hid_p // th
    grid = (nb, nk)

    # VMEM budget: double-buffered x/out tiles + per-chunk weights/biases, 2x margin,
    # floored at the default 32 MiB scoped limit, capped at physical VMEM minus headroom
    # (v7x-safe: never request more than the 64 MiB per-TC capacity).
    tile_bytes = (2 * tb * in_p * 2            # x tile (bf16)
                  + 2 * in_p * th * 2          # w1 chunk (bf16)
                  + 2 * th * ncls_p * 2        # w2 chunk (bf16)
                  + 2 * 2 * 8 * th * 4         # scale + folded bias chunks (f32, sublane-padded)
                  + 2 * 8 * ncls_p * 4         # b2 (f32, sublane-padded)
                  + 2 * tb * ncls_p * 4)       # out tile (f32)
    vmem_limit = int(min(_vmem_cap_bytes() - (8 << 20),
                         max(2 * tile_bytes + (2 << 20), 32 << 20)))

    flops = 2 * b_p * in_p * hid_p + 2 * b_p * hid_p * ncls_p
    bytes_accessed = (b_p * in_p * 2 + b_p * ncls_p * 4
                      + nb * (in_p * hid_p * 2 + hid_p * ncls_p * 2
                              + (2 * hid_p + ncls_p) * 4))

    out_p = pl.pallas_call(
        ff_classifier_kernel,
        out_shape=jax.ShapeDtypeStruct((b_p, ncls_p), jnp.float32),
        grid=grid,
        in_specs=[
            pl.BlockSpec((tb, in_p), lambda i, k: (i, 0)),       # x tile (pipelined)
            pl.BlockSpec((in_p, th), lambda i, k: (0, k)),       # w1 hidden-chunk (bf16)
            pl.BlockSpec((1, th), lambda i, k: (0, k)),          # BN scale chunk (f32)
            pl.BlockSpec((1, th), lambda i, k: (0, k)),          # folded bias chunk (f32)
            pl.BlockSpec((th, ncls_p), lambda i, k: (k, 0)),     # w2 hidden-chunk (bf16)
            pl.BlockSpec((1, ncls_p), lambda i, k: (0, 0)),      # b2
        ],
        out_specs=pl.BlockSpec((tb, ncls_p), lambda i, k: (i, 0)),  # lane-dense f32 logits
        compiler_params=pltpu.CompilerParams(
            dimension_semantics=("parallel", "arbitrary"),
            vmem_limit_bytes=vmem_limit,
        ),
        cost_estimate=pl.CostEstimate(flops=flops, transcendentals=0,
                                      bytes_accessed=bytes_accessed),
    )(x_bf, params.w1, params.scale, params.b1, params.w2, params.b2)

    # NOTE: padded batch rows / class columns contain garbage logits (relu(0)+bias flows
    # through layer 2); they MUST be sliced off here before any downstream use.
    return out_p[:B, :params.n_classes]


def init_params(key, input_dim, hidden_dim, n_classes):
    """Deterministic PyTorch-style init (uniform +/- 1/sqrt(fan_in))."""
    k1, k2, k3, k4, k5, k6 = jax.random.split(key, 6)
    bound1 = 1.0 / jnp.sqrt(input_dim)
    w1 = jax.random.uniform(k1, (hidden_dim, input_dim), jnp.float32, -bound1, bound1)
    b1 = jax.random.uniform(k2, (hidden_dim,), jnp.float32, -bound1, bound1)
    bound2 = 1.0 / jnp.sqrt(hidden_dim)
    w2 = jax.random.uniform(k3, (n_classes, hidden_dim), jnp.float32, -bound2, bound2)
    b2 = jax.random.uniform(k4, (n_classes,), jnp.float32, -bound2, bound2)
    # BatchNorm1d params / running stats (deterministic, non-trivial).
    gamma = 1.0 + 0.1 * jax.random.normal(k5, (hidden_dim,), jnp.float32)
    beta = 0.1 * jax.random.normal(k6, (hidden_dim,), jnp.float32)
    running_mean = 0.05 * jax.random.normal(k1, (hidden_dim,), jnp.float32)
    running_var = 1.0 + 0.1 * jnp.abs(jax.random.normal(k2, (hidden_dim,), jnp.float32))
    return w1, b1, w2, b2, gamma, beta, running_mean, running_var


def reference_forward(x, w1, b1, w2, b2, gamma, beta, rm, rv, eps=1e-5):
    """Pure-JAX f32 eval-mode reference (Linear -> BN -> ReLU -> Dropout(id) -> Linear)."""
    scale = gamma / jnp.sqrt(rv + eps)
    shift = beta - rm * scale
    h = x @ w1.T + b1
    h = jnp.maximum(h * scale + shift, 0.0)
    return h @ w2.T + b2


if __name__ == "__main__":
    batch, input_dim, hidden_dim, n_classes = 8, 32, 64, 16

    key = jax.random.PRNGKey(0)
    kx, kp = jax.random.split(key)
    x = jax.random.normal(kx, (batch, input_dim), jnp.float32)

    (w1, b1, w2, b2, gamma, beta, rm, rv) = init_params(kp, input_dim, hidden_dim, n_classes)

    # Weight-side prep (BN fold, transpose, pad, bf16 cast) runs ONCE, outside the per-call path.
    params = prepare_ff_params(w1, b1, w2, b2, gamma, beta, rm, rv)

    out = ff_classifier_forward(x, params)
    out = jax.block_until_ready(out)

    ref = reference_forward(x, w1, b1, w2, b2, gamma, beta, rm, rv)
    assert out.shape == (batch, n_classes)
    # bf16 MXU operands (x, w1, w2); BN scale and all accumulation kept in f32.
    assert jnp.allclose(out, ref, atol=5e-2, rtol=5e-2), "mismatch vs JAX reference"

    print("KERNEL_OK")
</pallas_src>

<mosaic_0001>
module attributes {stable_mosaic.version = 11 : i64} {
  func.func @ff_classifier_kernel(%arg0: i32, %arg1: i32, %arg2: memref<16x128xbf16, #tpu.memory_space<vmem>>, %arg3: memref<128x128xbf16, #tpu.memory_space<vmem>>, %arg4: memref<1x128xf32, #tpu.memory_space<vmem>>, %arg5: memref<1x128xf32, #tpu.memory_space<vmem>>, %arg6: memref<128x128xbf16, #tpu.memory_space<vmem>>, %arg7: memref<1x128xf32, #tpu.memory_space<vmem>>, %arg8: memref<16x128xf32, #tpu.memory_space<vmem>>) attributes {dimension_semantics = [#tpu.dimension_semantics<parallel>, #tpu.dimension_semantics<arbitrary>], iteration_bounds = array<i64: 1, 1>, scalar_prefetch = 0 : i64, scratch_operands = 0 : i64, tpu.core_type = #tpu.core_type<tc>, window_params = [{transform_indices = @transform_0, window_bounds = array<i64: 16, 128>}, {transform_indices = @transform_1, window_bounds = array<i64: 128, 128>}, {transform_indices = @transform_2, window_bounds = array<i64: 1, 128>}, {transform_indices = @transform_3, window_bounds = array<i64: 1, 128>}, {transform_indices = @transform_4, window_bounds = array<i64: 128, 128>}, {pipeline_mode = #tpu.pipeline_mode<synchronous>, transform_indices = @transform_5, window_bounds = array<i64: 1, 128>}, {transform_indices = @transform_6, window_bounds = array<i64: 16, 128>}]} {
    %c0_i32 = arith.constant 0 : i32
    %0 = arith.cmpi eq, %arg1, %c0_i32 : i32
    %1 = arith.extui %0 : i1 to i32
    %c0_i32_0 = arith.constant 0 : i32
    %2 = arith.cmpi ne, %1, %c0_i32_0 : i32
    scf.if %2 {
      %c0_16 = arith.constant 0 : index
      %c0_17 = arith.constant 0 : index
      %20 = vector.load %arg7[%c0_16, %c0_17] : memref<1x128xf32, #tpu.memory_space<vmem>>, vector<1x128xf32>
      %21 = vector.shape_cast %20 : vector<1x128xf32> to vector<1x128xf32>
      %22 = vector.broadcast %21 : vector<1x128xf32> to vector<16x128xf32>
      %c0_18 = arith.constant 0 : index
      %c0_19 = arith.constant 0 : index
      %23 = vector.load %arg8[%c0_18, %c0_19] : memref<16x128xf32, #tpu.memory_space<vmem>>, vector<16x128xf32>
      tpu.vector_store %arg8[%c0_18, %c0_19], %22 {strides = array<i32>} : memref<16x128xf32, #tpu.memory_space<vmem>>, vector<16x128xf32>,
    } else {
    }
    %c0 = arith.constant 0 : index
    %c0_1 = arith.constant 0 : index
    %3 = vector.load %arg2[%c0, %c0_1] : memref<16x128xbf16, #tpu.memory_space<vmem>>, vector<16x128xbf16>
    %c0_2 = arith.constant 0 : index
    %c0_3 = arith.constant 0 : index
    %4 = vector.load %arg3[%c0_2, %c0_3] : memref<128x128xbf16, #tpu.memory_space<vmem>>, vector<128x128xbf16>
    %cst = arith.constant dense<0.000000e+00> : vector<16x128xf32>
    %5 = tpu.matmul %3, %4, %cst {dimension_numbers = #tpu.dot_dimension_numbers<[1], [0], [0], [1], [0, 0, 1, 1], [], []>} : vector<16x128xbf16>, vector<128x128xbf16>, vector<16x128xf32> -> vector<16x128xf32>
    %c0_4 = arith.constant 0 : index
    %c0_5 = arith.constant 0 : index
    %6 = vector.load %arg4[%c0_4, %c0_5] : memref<1x128xf32, #tpu.memory_space<vmem>>, vector<1x128xf32>
    %7 = vector.broadcast %6 : vector<1x128xf32> to vector<16x128xf32>
    %8 = arith.mulf %5, %7 : vector<16x128xf32>
    %c0_6 = arith.constant 0 : index
    %c0_7 = arith.constant 0 : index
    %9 = vector.load %arg5[%c0_6, %c0_7] : memref<1x128xf32, #tpu.memory_space<vmem>>, vector<1x128xf32>
    %10 = vector.broadcast %9 : vector<1x128xf32> to vector<16x128xf32>
    %11 = arith.addf %8, %10 : vector<16x128xf32>
    %cst_8 = arith.constant 0.000000e+00 : f32
    %12 = vector.broadcast %cst_8 : f32 to vector<16x128xf32>
    %13 = arith.maximumf %11, %12 : vector<16x128xf32>
    %c0_9 = arith.constant 0 : index
    %c0_10 = arith.constant 0 : index
    %14 = vector.load %arg8[%c0_9, %c0_10] : memref<16x128xf32, #tpu.memory_space<vmem>>, vector<16x128xf32>
    %15 = arith.truncf %13 : vector<16x128xf32> to vector<16x128xbf16>
    %c0_11 = arith.constant 0 : index
    %c0_12 = arith.constant 0 : index
    %16 = vector.load %arg6[%c0_11, %c0_12] : memref<128x128xbf16, #tpu.memory_space<vmem>>, vector<128x128xbf16>
    %cst_13 = arith.constant dense<0.000000e+00> : vector<16x128xf32>
    %17 = tpu.matmul %15, %16, %cst_13 {dimension_numbers = #tpu.dot_dimension_numbers<[1], [0], [0], [1], [0, 0, 1, 1], [], []>} : vector<16x128xbf16>, vector<128x128xbf16>, vector<16x128xf32> -> vector<16x128xf32>
    %18 = arith.addf %14, %17 : vector<16x128xf32>
    %c0_14 = arith.constant 0 : index
    %c0_15 = arith.constant 0 : index
    %19 = vector.load %arg8[%c0_14, %c0_15] : memref<16x128xf32, #tpu.memory_space<vmem>>, vector<16x128xf32>
    tpu.vector_store %arg8[%c0_14, %c0_15], %18 {strides = array<i32>} : memref<16x128xf32, #tpu.memory_space<vmem>>, vector<16x128xf32>,
    return
  }
  func.func @transform_0(%arg0: i32, %arg1: i32) -> (i32, i32) {
    %c0_i32 = arith.constant 0 : i32
    %c0_i32_0 = arith.constant 0 : i32
    return %arg0, %c0_i32 : i32, i32
  }
  func.func @transform_1(%arg0: i32, %arg1: i32) -> (i32, i32) {
    %c0_i32 = arith.constant 0 : i32
    %c0_i32_0 = arith.constant 0 : i32
    return %c0_i32, %arg1 : i32, i32
  }
  func.func @transform_2(%arg0: i32, %arg1: i32) -> (i32, i32) {
    %c0_i32 = arith.constant 0 : i32
    %c0_i32_0 = arith.constant 0 : i32
    return %c0_i32, %arg1 : i32, i32
  }
  func.func @transform_3(%arg0: i32, %arg1: i32) -> (i32, i32) {
    %c0_i32 = arith.constant 0 : i32
    %c0_i32_0 = arith.constant 0 : i32
    return %c0_i32, %arg1 : i32, i32
  }
  func.func @transform_4(%arg0: i32, %arg1: i32) -> (i32, i32) {
    %c0_i32 = arith.constant 0 : i32
    %c0_i32_0 = arith.constant 0 : i32
    return %arg1, %c0_i32 : i32, i32
  }
  func.func @transform_5(%arg0: i32, %arg1: i32) -> (i32, i32) {
    %c0_i32 = arith.constant 0 : i32
    %c0_i32_0 = arith.constant 0 : i32
    %c0_i32_1 = arith.constant 0 : i32
    return %c0_i32, %c0_i32_0 : i32, i32
  }
  func.func @transform_6(%arg0: i32, %arg1: i32) -> (i32, i32) {
    %c0_i32 = arith.constant 0 : i32
    %c0_i32_0 = arith.constant 0 : i32
    return %arg0, %c0_i32 : i32, i32
  }
}

</mosaic_0001>

<llo_original>
// kernel: tpu_custom_call.1
$region0: #{tpu_custom_call.1}
  #allocation0 [shape = 'u32[]', space=smem, size = 0x4, offset = 0x4, fixed_abs, tag = 'smem constant byte address 0x4 - core index']
  #allocation1 [shape = 'u32[72,128]{1,0:T(1,128)}', space=vmem, size = 0x9000, scoped, tag = 'internal scratch']
  %s0 = inlined_call_operand.hbm [shape: bf16[16,128], index: 0, kind: input, shape index: {}]
  %s1 = inlined_call_operand.hbm [shape: bf16[128,128], index: 1, kind: input, shape index: {}]
  %s2 = inlined_call_operand.vmem [shape: f32[1,128], index: 2, kind: input, shape index: {}]
  %s3 = inlined_call_operand.vmem [shape: f32[1,128], index: 3, kind: input, shape index: {}]
  %s4 = inlined_call_operand.hbm [shape: bf16[128,128], index: 4, kind: input, shape index: {}]
  %s5 = inlined_call_operand.vmem [shape: f32[1,128], index: 5, kind: input, shape index: {}]
  %s6 = inlined_call_operand.hbm [shape: f32[16,128], index: 6, kind: output, shape index: {}]
  %s7 = sld [smem:[#allocation0]]
  $region50: #{tpu_custom_call.1} parent=0
    _
  %s9 = ssub.s32 1, %s7
  %s10 = scalar_select 0, %s9, %s7
  $region1: #{tpu_custom_call.1} parent=0
    #allocation2 [shape = 'u8[4096]{0}', space=vmem, size = 0x1000, scoped, tag = 'input window, operand 0, single buffered']
    #allocation3 [shape = 's32[1]{0}', space=sflag, size = 0x4, scoped, tag = 'scoped memory for tpu_custom_call.1']
    #allocation4 [shape = 's32[1]{0}', space=sflag, size = 0x4, scoped, tag = 'scoped memory for tpu_custom_call.1']
    #allocation5 [shape = 'u8[32768]{0}', space=vmem, size = 0x8000, scoped, tag = 'input window, operand 1, single buffered']
    #allocation6 [shape = 's32[1]{0}', space=sflag, size = 0x4, scoped, tag = 'scoped memory for tpu_custom_call.1']
    #allocation7 [shape = 'u8[32768]{0}', space=vmem, size = 0x8000, scoped, tag = 'input window, operand 4, single buffered']
    #allocation8 [shape = 'u8[8192]{0}', space=vmem, size = 0x2000, scoped, tag = 'output window, operand 0, single buffered']
    %11 = vsyncpa [#allocation3], 0
    %12 = vsyncpa [#allocation6], 0
    %13 = vsyncpa [#allocation4], 0
    // Predicated region
    $region2: #{tpu_custom_call.1} parent=1 // pred_check
      _
    $region3: #{tpu_custom_call.1} parent=1 // pred_check_branch
      %15 = sbr.rel (0) target = $region5
    $region4: #{tpu_custom_call.1} parent=1 // pred_region
      %17 = vsyncadd [#allocation3], 0
      %s18 = sshll.u32 %s0, 4
      %s19 = int_to_ptr.hbm [resolvable:$true] %s18
      %s20 = sshll.u32 [#allocation2], 4
      %s21 = int_to_ptr.vmem [resolvable:$true] %s20
      %26 = dma.hbm_to_vmem [thread:$0]  %s19, 128, %s21, [#allocation3], 64, 64, 4
    $region5: #{tpu_custom_call.1} parent=1 // pred_fallthru
      _
    // Predicated region
    $region6: #{tpu_custom_call.1} parent=1 // pred_check
      _
    $region7: #{tpu_custom_call.1} parent=1 // pred_check_branch
      %28 = sbr.rel (0) target = $region9
    $region8: #{tpu_custom_call.1} parent=1 // pred_region
      %30 = vsyncadd [#allocation6], 0
      %s31 = sshll.u32 %s1, 4
      %s32 = int_to_ptr.hbm [resolvable:$true] %s31
      %s33 = sshll.u32 [#allocation5], 4
      %s34 = int_to_ptr.vmem [resolvable:$true] %s33
      %39 = dma.hbm_to_vmem [thread:$0]  %s32, 1024, %s34, [#allocation6], 64, 64, 4
    $region9: #{tpu_custom_call.1} parent=1 // pred_fallthru
      _
    // Predicated region
    $region10: #{tpu_custom_call.1} parent=1 // pred_check
      _
    $region11: #{tpu_custom_call.1} parent=1 // pred_check_branch
      %41 = sbr.rel (0) target = $region13
    $region12: #{tpu_custom_call.1} parent=1 // pred_region
      _
    $region13: #{tpu_custom_call.1} parent=1 // pred_fallthru
      _
    // Predicated region
    $region14: #{tpu_custom_call.1} parent=1 // pred_check
      _
    $region15: #{tpu_custom_call.1} parent=1 // pred_check_branch
      %43 = sbr.rel (0) target = $region17
    $region16: #{tpu_custom_call.1} parent=1 // pred_region
      _
    $region17: #{tpu_custom_call.1} parent=1 // pred_fallthru
      _
    // Predicated region
    $region18: #{tpu_custom_call.1} parent=1 // pred_check
      _
    $region19: #{tpu_custom_call.1} parent=1 // pred_check_branch
      %45 = sbr.rel (0) target = $region21
    $region20: #{tpu_custom_call.1} parent=1 // pred_region
      %47 = vsyncadd [#allocation6], 0
      %s48 = sshll.u32 %s4, 4
      %s49 = int_to_ptr.hbm [resolvable:$true] %s48
      %s50 = sshll.u32 [#allocation7], 4
      %s51 = int_to_ptr.vmem [resolvable:$true] %s50
      %56 = dma.hbm_to_vmem [thread:$0]  %s49, 1024, %s51, [#allocation6], 64, 64, 4
    $region21: #{tpu_custom_call.1} parent=1 // pred_fallthru
      _
    // Predicated region
    $region22: #{tpu_custom_call.1} parent=1 // pred_check
      _
    $region23: #{tpu_custom_call.1} parent=1 // pred_check_branch
      %58 = sbr.rel (0) target = $region25
    $region24: #{tpu_custom_call.1} parent=1 // pred_region
      _
    $region25: #{tpu_custom_call.1} parent=1 // pred_fallthru
      _
    // Predicated region
    $region26: #{tpu_custom_call.1} parent=1 // pred_check
      _
    $region27: #{tpu_custom_call.1} parent=1 // pred_check_branch
      %60 = sbr.rel (0) target = $region29
    $region28: #{tpu_custom_call.1} parent=1 // pred_region
      %62 = dma.done [#allocation3], 128
    $region29: #{tpu_custom_call.1} parent=1 // pred_fallthru
      _
    // Predicated region
    $region30: #{tpu_custom_call.1} parent=1 // pred_check
      _
    $region31: #{tpu_custom_call.1} parent=1 // pred_check_branch
      %64 = sbr.rel (0) target = $region33
    $region32: #{tpu_custom_call.1} parent=1 // pred_region
      %66 = dma.done [#allocation6], 1024
    $region33: #{tpu_custom_call.1} parent=1 // pred_fallthru
      _
    // Predicated region
    $region34: #{tpu_custom_call.1} parent=1 // pred_check
      _
    $region35: #{tpu_custom_call.1} parent=1 // pred_check_branch
      %68 = sbr.rel (0) target = $region37
    $region36: #{tpu_custom_call.1} parent=1 // pred_region
      %70 = dma.done [#allocation6], 1024
    $region37: #{tpu_custom_call.1} parent=1 // pred_fallthru
      _
    %p71 = scmp.eq.s32.totalorder 0, 0
    // Predicated region
    $region38: #{tpu_custom_call.1} parent=1 // pred_check
      %p72 = pneg %p71
    $region39: #{tpu_custom_call.1} parent=1 // pred_check_branch
      %74 = sbr.rel (%p72) target = $region41
    $region40: #{tpu_custom_call.1} parent=1 // pred_region
      %v75 = vld [vmem:[%s5] sm:$0x1]
      %v77 = vperm.slane %v75, 0
      %79 = vst [vmem:[#allocation8] sm:$0xff] %v77
      %80 = vst [vmem:[#allocation8 + $0x8] sm:$0xff] %v77
    $region41: #{tpu_custom_call.1} parent=1 // pred_fallthru
      _
    %v81 = vld [vmem:[#allocation2] sm:$0xf]
    %v82 = vld [vmem:[#allocation2 + $0x4] sm:$0xf]
    %v83 = vld [vmem:[#allocation5] sm:$0xf]
    %v84 = vld [vmem:[#allocation5 + $0x4] sm:$0xf]
    %v85 = vld [vmem:[#allocation5 + $0x8] sm:$0xf]
    %v86 = vld [vmem:[#allocation5 + $0xc] sm:$0xf]
    %v87 = vld [vmem:[#allocation5 + $0x10] sm:$0xf]
    %v88 = vld [vmem:[#allocation5 + $0x14] sm:$0xf]
    %v89 = vld [vmem:[#allocation5 + $0x18] sm:$0xf]
    %v90 = vld [vmem:[#allocation5 + $0x1c] sm:$0xf]
    %v91 = vld [vmem:[#allocation5 + $0x20] sm:$0xf]
    %v92 = vld [vmem:[#allocation5 + $0x24] sm:$0xf]
    %v93 = vld [vmem:[#allocation5 + $0x28] sm:$0xf]
    %v94 = vld [vmem:[#allocation5 + $0x2c] sm:$0xf]
    %v95 = vld [vmem:[#allocation5 + $0x30] sm:$0xf]
    %v96 = vld [vmem:[#allocation5 + $0x34] sm:$0xf]
    %v97 = vld [vmem:[#allocation5 + $0x38] sm:$0xf]
    %v98 = vld [vmem:[#allocation5 + $0x3c] sm:$0xf]
    %v101 = vunpack.c.l.b16 %v81
    %v102 = vunpack.c.l.b16 %v82
    %v103 = vpack.c.b16 %v102, %v101
    %v121 = vunpack.c.l.b16 %v83
    %v122 = vunpack.c.l.b16 %v84
    %v123 = vunpack.c.l.b16 %v85
    %v124 = vunpack.c.l.b16 %v86
    %v125 = vunpack.c.l.b16 %v87
    %v126 = vunpack.c.l.b16 %v88
    %v127 = vunpack.c.l.b16 %v89
    %v128 = vunpack.c.l.b16 %v90
    %v129 = vunpack.c.l.b16 %v91
    %v130 = vunpack.c.l.b16 %v92
    %v131 = vunpack.c.l.b16 %v93
    %v132 = vunpack.c.l.b16 %v94
    %v133 = vunpack.c.l.b16 %v95
    %v134 = vunpack.c.l.b16 %v96
    %v135 = vunpack.c.l.b16 %v97
    %v136 = vunpack.c.l.b16 %v98
    %v137 = vpack.c.b16 %v122, %v121
    %v138 = vpack.c.b16 %v124, %v123
    %v139 = vpack.c.b16 %v126, %v125
    %v140 = vpack.c.b16 %v128, %v127
    %v141 = vpack.c.b16 %v130, %v129
    %v142 = vpack.c.b16 %v132, %v131
    %v143 = vpack.c.b16 %v134, %v133
    %v144 = vpack.c.b16 %v136, %v135
    %153 = vmatpush.bf16.msra.mxu0 %v144
    %154 = vmatpush.bf16.msra.mxu0 %v143
    %155 = vmatpush.bf16.msra.mxu0 %v142
    %156 = vmatpush.bf16.msra.mxu0 %v141
    %157 = vmatpush.bf16.msra.mxu0 %v140
    %158 = vmatpush.bf16.msra.mxu0 %v139
    %159 = vmatpush.bf16.msra.mxu0 %v138
    %160 = vmatpush.bf16.msra.mxu0 %v137
    %161 = vmatmul.bf16.gmra.mxu0 %v103
    %v162 = vpop.f32.mrf.mxu0
    %v163 = vadd.f32 0.0, %v162
    %v164 = vpop.f32.mrf.mxu0
    %v165 = vadd.f32 0.0, %v164
    %166 = vdwg.mxu0
    %v167 = vld [vmem:[%s2] sm:$0x1]
    %v169 = vperm.slane %v167, 0
    %v171 = vmul.f32 %v163, %v169
    %v172 = vmul.f32 %v165, %v169
    %v173 = vld [vmem:[%s3] sm:$0x1]
    %v175 = vperm.slane %v173, 0
    %v177 = vadd.f32 %v171, %v175
    %v178 = vadd.f32 %v172, %v175
    %v179 = vmax.f32 %v177, 0.0
    %v180 = vmax.f32 %v178, 0.0
    %v181 = vld [vmem:[#allocation8] sm:$0xff]
    %v182 = vld [vmem:[#allocation8 + $0x8] sm:$0xff]
    %v183 = vpack.c.bf16 %v180, %v179
    %v184 = vld [vmem:[#allocation7] sm:$0xf]
    %v185 = vld [vmem:[#allocation7 + $0x4] sm:$0xf]
    %v186 = vld [vmem:[#allocation7 + $0x8] sm:$0xf]
    %v187 = vld [vmem:[#allocation7 + $0xc] sm:$0xf]
    %v188 = vld [vmem:[#allocation7 + $0x10] sm:$0xf]
    %v189 = vld [vmem:[#allocation7 + $0x14] sm:$0xf]
    %v190 = vld [vmem:[#allocation7 + $0x18] sm:$0xf]
    %v191 = vld [vmem:[#allocation7 + $0x1c] sm:$0xf]
    %v192 = vld [vmem:[#allocation7 + $0x20] sm:$0xf]
    %v193 = vld [vmem:[#allocation7 + $0x24] sm:$0xf]
    %v194 = vld [vmem:[#allocation7 + $0x28] sm:$0xf]
    %v195 = vld [vmem:[#allocation7 + $0x2c] sm:$0xf]
    %v196 = vld [vmem:[#allocation7 + $0x30] sm:$0xf]
    %v197 = vld [vmem:[#allocation7 + $0x34] sm:$0xf]
    %v198 = vld [vmem:[#allocation7 + $0x38] sm:$0xf]
    %v199 = vld [vmem:[#allocation7 + $0x3c] sm:$0xf]
    %v216 = vunpack.c.l.b16 %v184
    %v217 = vunpack.c.l.b16 %v185
    %v218 = vunpack.c.l.b16 %v186
    %v219 = vunpack.c.l.b16 %v187
    %v220 = vunpack.c.l.b16 %v188
    %v221 = vunpack.c.l.b16 %v189
    %v222 = vunpack.c.l.b16 %v190
    %v223 = vunpack.c.l.b16 %v191
    %v224 = vunpack.c.l.b16 %v192
    %v225 = vunpack.c.l.b16 %v193
    %v226 = vunpack.c.l.b16 %v194
    %v227 = vunpack.c.l.b16 %v195
    %v228 = vunpack.c.l.b16 %v196
    %v229 = vunpack.c.l.b16 %v197
    %v230 = vunpack.c.l.b16 %v198
    %v231 = vunpack.c.l.b16 %v199
    %v232 = vpack.c.b16 %v217, %v216
    %v233 = vpack.c.b16 %v219, %v218
    %v234 = vpack.c.b16 %v221, %v220
    %v235 = vpack.c.b16 %v223, %v222
    %v236 = vpack.c.b16 %v225, %v224
    %v237 = vpack.c.b16 %v227, %v226
    %v238 = vpack.c.b16 %v229, %v228
    %v239 = vpack.c.b16 %v231, %v230
    %248 = vmatpush.bf16.msra.mxu0 %v239
    %249 = vmatpush.bf16.msra.mxu0 %v238
    %250 = vmatpush.bf16.msra.mxu0 %v237
    %251 = vmatpush.bf16.msra.mxu0 %v236
    %252 = vmatpush.bf16.msra.mxu0 %v235
    %253 = vmatpush.bf16.msra.mxu0 %v234
    %254 = vmatpush.bf16.msra.mxu0 %v233
    %255 = vmatpush.bf16.msra.mxu0 %v232
    %256 = vmatmul.bf16.gmra.mxu0 %v183
    %v257 = vpop.f32.mrf.mxu0
    %v258 = vadd.f32 0.0, %v257
    %v259 = vpop.f32.mrf.mxu0
    %v260 = vadd.f32 0.0, %v259
    %261 = vdwg.mxu0
    %v262 = vadd.f32 %v181, %v258
    %v263 = vadd.f32 %v182, %v260
    %264 = vst [vmem:[#allocation8] sm:$0xff] %v262
    %265 = vst [vmem:[#allocation8 + $0x8] sm:$0xff] %v263
    // Predicated region
    $region42: #{tpu_custom_call.1} parent=1 // pred_check
      _
    $region43: #{tpu_custom_call.1} parent=1 // pred_check_branch
      %267 = sbr.rel (0) target = $region45
    $region44: #{tpu_custom_call.1} parent=1 // pred_region
      %269 = vsyncadd [#allocation4], 0
      %s270 = sshll.u32 [#allocation8], 4
      %s271 = int_to_ptr.vmem [resolvable:$true] %s270
      %s272 = sshll.u32 %s6, 4
      %s273 = int_to_ptr.hbm [resolvable:$true] %s272
      %278 = dma.vmem_to_hbm [thread:$0]  %s271, 256, %s273, [#allocation4], 128, 128, 8
    $region45: #{tpu_custom_call.1} parent=1 // pred_fallthru
      _
    // Predicated region
    $region46: #{tpu_custom_call.1} parent=1 // pred_check
      _
    $region47: #{tpu_custom_call.1} parent=1 // pred_check_branch
      %280 = sbr.rel (0) target = $region49
    $region48: #{tpu_custom_call.1} parent=1 // pred_region
      %282 = dma.done [#allocation4], 256
    $region49: #{tpu_custom_call.1} parent=1 // pred_fallthru
      _
    %283 = vsyncpa [#allocation3], 1
    %284 = vsyncpa [#allocation6], 1
    %285 = vsyncpa [#allocation4], 1

</llo_original>
